<compile_context>
chip_gen: v5e
topology: v5e:2x2
jax: 0.10.0
libtpu: 0.0.40
codegen_flags: <defaults>
</compile_context>

<pallas_src>
import functools

import jax
import jax.numpy as jnp
from jax.experimental import pallas as pl
from jax.experimental.pallas import tpu as pltpu


def _round_up(n, m):
    return ((n + m - 1) // m) * m


def _fused_mlp_kernel(*refs, num_layers, compute_dtype):
    """refs = (x, w_0..w_{L-1}, b_0..b_{L-1}, out_0..out_{L-1}).

    x:     (Bp, F0p)  f32
    w_i:   (F_ip, F_{i+1}p)  compute_dtype (already transposed to Fin x Fout)
    b_i:   (1, F_{i+1}p)     f32
    out_i: (Bp, F_{i+1}p)    f32 (lane-dense: F padded to multiple of 128)
    """
    x_ref = refs[0]
    w_refs = refs[1:1 + num_layers]
    b_refs = refs[1 + num_layers:1 + 2 * num_layers]
    out_refs = refs[1 + 2 * num_layers:]

    act = x_ref[...]  # f32 running activation, stays on-chip between layers
    for i in range(num_layers):
        # bf16 x bf16 -> f32 accumulation on the MXU; no transpose in-kernel.
        acc = jnp.dot(
            act.astype(compute_dtype),
            w_refs[i][...],
            preferred_element_type=jnp.float32,
        )
        act = acc + b_refs[i][...]          # f32 bias-add epilogue
        out_refs[i][...] = act              # lane-dense full-width store


def fused_mlp_forward(x, params, *, compute_dtype=jnp.bfloat16,
                      lane=128, sublane=8):
    """Run every linear layer of `params` in one fused Pallas kernel.

    x:      (B, F0) f32
    params: list of (w, b) with PyTorch-shaped w: (Fout, Fin), b: (Fout,)
    Returns the list of per-layer outputs (unpadded), like SimpleLinearModel.forward.
    """
    num_layers = len(params)
    B, F0 = x.shape
    dims = [F0] + [w.shape[0] for (w, _) in params]
    pdims = [_round_up(d, lane) for d in dims]
    Bp = _round_up(B, sublane)

    # Pad input (zeros in padded rows/cols contribute nothing to the matmul).
    x_pad = jnp.zeros((Bp, pdims[0]), jnp.float32).at[:B, :F0].set(
        x.astype(jnp.float32))

    # Pre-transpose + pad weights to (Fin_p, Fout_p) in bf16; pad biases in f32.
    w_list, b_list = [], []
    for i, (w, b) in enumerate(params):
        fout, fin = w.shape
        assert fin == dims[i] and fout == dims[i + 1]
        wt = jnp.zeros((pdims[i], pdims[i + 1]), compute_dtype)
        wt = wt.at[:fin, :fout].set(w.T.astype(compute_dtype))
        bp = jnp.zeros((1, pdims[i + 1]), jnp.float32)
        bp = bp.at[0, :fout].set(b.astype(jnp.float32))
        w_list.append(wt)
        b_list.append(bp)

    out_shape = tuple(
        jax.ShapeDtypeStruct((Bp, pdims[i + 1]), jnp.float32)
        for i in range(num_layers)
    )

    vmem = lambda: pl.BlockSpec(memory_space=pltpu.MemorySpace.VMEM)
    kernel = functools.partial(
        _fused_mlp_kernel, num_layers=num_layers, compute_dtype=compute_dtype)

    outs_pad = pl.pallas_call(
        kernel,
        out_shape=out_shape,
        in_specs=[vmem() for _ in range(1 + 2 * num_layers)],
        out_specs=tuple(vmem() for _ in range(num_layers)),
    )(x_pad, *w_list, *b_list)

    # Slice padding back off for each collected layer output.
    return [outs_pad[i][:B, :dims[i + 1]] for i in range(num_layers)]


def simple_linear_model_forward(x, params):
    """Mirrors SimpleLinearModel.forward: every layer output is collected and
    returned (as JAX arrays rather than Python lists)."""
    return fused_mlp_forward(x, params)


def make_params(key, layer_dims):
    """Deterministic synthetic parameters; weights PyTorch-shaped (Fout, Fin)."""
    params = []
    for i in range(len(layer_dims) - 1):
        fin, fout = layer_dims[i], layer_dims[i + 1]
        key, kw, kb = jax.random.split(key, 3)
        w = jax.random.normal(kw, (fout, fin), dtype=jnp.float32) * 0.05
        b = jax.random.normal(kb, (fout,), dtype=jnp.float32) * 0.01
        params.append((w, b))
    return params


def reference_forward_f32(x, params):
    """Pure-f32 reference (PyTorch semantics)."""
    outs = []
    for (w, b) in params:
        x = x @ w.T + b
        outs.append(x)
    return outs


def reference_forward_matched(x, params, compute_dtype=jnp.bfloat16):
    """Reference that mirrors the kernel's bf16-input / f32-accumulate math."""
    outs = []
    act = x.astype(jnp.float32)
    for (w, b) in params:
        acc = jnp.dot(act.astype(compute_dtype), w.T.astype(compute_dtype),
                      preferred_element_type=jnp.float32)
        act = acc + b.astype(jnp.float32)
        outs.append(act)
    return outs


if __name__ == "__main__":
    key = jax.random.PRNGKey(0)
    kx, kp = jax.random.split(key)

    batch = 2
    layer_dims = [32, 64, 48, 16]  # 3 linear layers: 32 -> 64 -> 48 -> 16
    x = jax.random.normal(kx, (batch, layer_dims[0]), dtype=jnp.float32)
    params = make_params(kp, layer_dims)

    outs = simple_linear_model_forward(x, params)
    outs = [jax.block_until_ready(o) for o in outs]

    # Check vs. bf16-matched reference (tight) and pure-f32 reference (bf16-level tol).
    refs_m = reference_forward_matched(x, params)
    refs_f = reference_forward_f32(x, params)
    for o, rm, rf in zip(outs, refs_m, refs_f):
        assert o.shape == rf.shape
        assert jnp.allclose(o, rm, atol=1e-3, rtol=1e-3), \
            float(jnp.max(jnp.abs(o - rm)))
        assert jnp.allclose(o, rf, atol=5e-2, rtol=5e-2), \
            float(jnp.max(jnp.abs(o - rf)))

    print("KERNEL_OK")
</pallas_src>

<mosaic_0001>
module attributes {stable_mosaic.version = 11 : i64} {
  func.func @_fused_mlp_kernel(%arg0: memref<8x128xf32, #tpu.memory_space<vmem>>, %arg1: memref<128x128xbf16, #tpu.memory_space<vmem>>, %arg2: memref<128x128xbf16, #tpu.memory_space<vmem>>, %arg3: memref<128x128xbf16, #tpu.memory_space<vmem>>, %arg4: memref<1x128xf32, #tpu.memory_space<vmem>>, %arg5: memref<1x128xf32, #tpu.memory_space<vmem>>, %arg6: memref<1x128xf32, #tpu.memory_space<vmem>>, %arg7: memref<8x128xf32, #tpu.memory_space<vmem>>, %arg8: memref<8x128xf32, #tpu.memory_space<vmem>>, %arg9: memref<8x128xf32, #tpu.memory_space<vmem>>) attributes {dimension_semantics = [], scalar_prefetch = 0 : i64, scratch_operands = 0 : i64, tpu.core_type = #tpu.core_type<tc>} {
    %c0 = arith.constant 0 : index
    %c0_0 = arith.constant 0 : index
    %0 = vector.load %arg0[%c0, %c0_0] : memref<8x128xf32, #tpu.memory_space<vmem>>, vector<8x128xf32>
    %1 = arith.truncf %0 : vector<8x128xf32> to vector<8x128xbf16>
    %c0_1 = arith.constant 0 : index
    %c0_2 = arith.constant 0 : index
    %2 = vector.load %arg1[%c0_1, %c0_2] : memref<128x128xbf16, #tpu.memory_space<vmem>>, vector<128x128xbf16>
    %cst = arith.constant dense<0.000000e+00> : vector<8x128xf32>
    %3 = tpu.matmul %1, %2, %cst {dimension_numbers = #tpu.dot_dimension_numbers<[1], [0], [0], [1], [0, 0, 1, 1], [], []>} : vector<8x128xbf16>, vector<128x128xbf16>, vector<8x128xf32> -> vector<8x128xf32>
    %c0_3 = arith.constant 0 : index
    %c0_4 = arith.constant 0 : index
    %4 = vector.load %arg4[%c0_3, %c0_4] : memref<1x128xf32, #tpu.memory_space<vmem>>, vector<1x128xf32>
    %5 = vector.broadcast %4 : vector<1x128xf32> to vector<8x128xf32>
    %6 = arith.addf %3, %5 : vector<8x128xf32>
    %c0_5 = arith.constant 0 : index
    %c0_6 = arith.constant 0 : index
    %7 = vector.load %arg7[%c0_5, %c0_6] : memref<8x128xf32, #tpu.memory_space<vmem>>, vector<8x128xf32>
    tpu.vector_store %arg7[%c0_5, %c0_6], %6 {strides = array<i32>} : memref<8x128xf32, #tpu.memory_space<vmem>>, vector<8x128xf32>,
    %8 = arith.truncf %6 : vector<8x128xf32> to vector<8x128xbf16>
    %c0_7 = arith.constant 0 : index
    %c0_8 = arith.constant 0 : index
    %9 = vector.load %arg2[%c0_7, %c0_8] : memref<128x128xbf16, #tpu.memory_space<vmem>>, vector<128x128xbf16>
    %cst_9 = arith.constant dense<0.000000e+00> : vector<8x128xf32>
    %10 = tpu.matmul %8, %9, %cst_9 {dimension_numbers = #tpu.dot_dimension_numbers<[1], [0], [0], [1], [0, 0, 1, 1], [], []>} : vector<8x128xbf16>, vector<128x128xbf16>, vector<8x128xf32> -> vector<8x128xf32>
    %c0_10 = arith.constant 0 : index
    %c0_11 = arith.constant 0 : index
    %11 = vector.load %arg5[%c0_10, %c0_11] : memref<1x128xf32, #tpu.memory_space<vmem>>, vector<1x128xf32>
    %12 = vector.broadcast %11 : vector<1x128xf32> to vector<8x128xf32>
    %13 = arith.addf %10, %12 : vector<8x128xf32>
    %c0_12 = arith.constant 0 : index
    %c0_13 = arith.constant 0 : index
    %14 = vector.load %arg8[%c0_12, %c0_13] : memref<8x128xf32, #tpu.memory_space<vmem>>, vector<8x128xf32>
    tpu.vector_store %arg8[%c0_12, %c0_13], %13 {strides = array<i32>} : memref<8x128xf32, #tpu.memory_space<vmem>>, vector<8x128xf32>,
    %15 = arith.truncf %13 : vector<8x128xf32> to vector<8x128xbf16>
    %c0_14 = arith.constant 0 : index
    %c0_15 = arith.constant 0 : index
    %16 = vector.load %arg3[%c0_14, %c0_15] : memref<128x128xbf16, #tpu.memory_space<vmem>>, vector<128x128xbf16>
    %cst_16 = arith.constant dense<0.000000e+00> : vector<8x128xf32>
    %17 = tpu.matmul %15, %16, %cst_16 {dimension_numbers = #tpu.dot_dimension_numbers<[1], [0], [0], [1], [0, 0, 1, 1], [], []>} : vector<8x128xbf16>, vector<128x128xbf16>, vector<8x128xf32> -> vector<8x128xf32>
    %c0_17 = arith.constant 0 : index
    %c0_18 = arith.constant 0 : index
    %18 = vector.load %arg6[%c0_17, %c0_18] : memref<1x128xf32, #tpu.memory_space<vmem>>, vector<1x128xf32>
    %19 = vector.broadcast %18 : vector<1x128xf32> to vector<8x128xf32>
    %20 = arith.addf %17, %19 : vector<8x128xf32>
    %c0_19 = arith.constant 0 : index
    %c0_20 = arith.constant 0 : index
    %21 = vector.load %arg9[%c0_19, %c0_20] : memref<8x128xf32, #tpu.memory_space<vmem>>, vector<8x128xf32>
    tpu.vector_store %arg9[%c0_19, %c0_20], %20 {strides = array<i32>} : memref<8x128xf32, #tpu.memory_space<vmem>>, vector<8x128xf32>,
    return
  }
}

</mosaic_0001>

<llo_original>
// kernel: tpu_custom_call.1
$region0: #{tpu_custom_call.1}
  #allocation0 [shape = 'u32[]', space=smem, size = 0x4, offset = 0x4, fixed_abs, tag = 'smem constant byte address 0x4 - core index']
  #allocation1 [shape = 'u32[72,128]{1,0:T(1,128)}', space=vmem, size = 0x9000, scoped, tag = 'internal scratch']
  %s0 = inlined_call_operand.hbm [shape: f32[8,128], index: 0, kind: input, shape index: {}]
  %s1 = inlined_call_operand.hbm [shape: bf16[128,128], index: 1, kind: input, shape index: {}]
  %s2 = inlined_call_operand.hbm [shape: bf16[128,128], index: 2, kind: input, shape index: {}]
  %s3 = inlined_call_operand.hbm [shape: bf16[128,128], index: 3, kind: input, shape index: {}]
  %s4 = inlined_call_operand.vmem [shape: f32[1,128], index: 4, kind: input, shape index: {}]
  %s5 = inlined_call_operand.vmem [shape: f32[1,128], index: 5, kind: input, shape index: {}]
  %s6 = inlined_call_operand.vmem [shape: f32[1,128], index: 6, kind: input, shape index: {}]
  %s7 = inlined_call_operand.hbm [shape: f32[8,128], index: 7, kind: output, shape index: {0}]
  %s8 = inlined_call_operand.hbm [shape: f32[8,128], index: 8, kind: output, shape index: {1}]
  %s9 = inlined_call_operand.hbm [shape: f32[8,128], index: 9, kind: output, shape index: {2}]
  %10 = xla_tuple %s7, %s8, %s9
  %s11 = sld [smem:[#allocation0]]
  $region70: #{tpu_custom_call.1} parent=0
    _
  %s13 = ssub.s32 1, %s11
  %s14 = scalar_select 0, %s13, %s11
  $region1: #{tpu_custom_call.1} parent=0
    #allocation2 [shape = 'u8[4096]{0}', space=vmem, size = 0x1000, scoped, tag = 'input window, operand 0, single buffered']
    #allocation3 [shape = 's32[1]{0}', space=sflag, size = 0x4, scoped, tag = 'scoped memory for tpu_custom_call.1']
    #allocation4 [shape = 's32[1]{0}', space=sflag, size = 0x4, scoped, tag = 'scoped memory for tpu_custom_call.1']
    #allocation5 [shape = 'u8[32768]{0}', space=vmem, size = 0x8000, scoped, tag = 'input window, operand 1, single buffered']
    #allocation6 [shape = 's32[1]{0}', space=sflag, size = 0x4, scoped, tag = 'scoped memory for tpu_custom_call.1']
    #allocation7 [shape = 'u8[32768]{0}', space=vmem, size = 0x8000, scoped, tag = 'input window, operand 2, single buffered']
    #allocation8 [shape = 'u8[32768]{0}', space=vmem, size = 0x8000, scoped, tag = 'input window, operand 3, single buffered']
    #allocation9 [shape = 's32[1]{0}', space=sflag, size = 0x4, scoped, tag = 'scoped memory for tpu_custom_call.1']
    #allocation10 [shape = 'u8[4096]{0}', space=vmem, size = 0x1000, scoped, tag = 'output window, operand 0, single buffered']
    #allocation11 [shape = 'u8[4096]{0}', space=vmem, size = 0x1000, scoped, tag = 'output window, operand 1, single buffered']
    #allocation12 [shape = 's32[1]{0}', space=sflag, size = 0x4, scoped, tag = 'scoped memory for tpu_custom_call.1']
    #allocation13 [shape = 'u8[4096]{0}', space=vmem, size = 0x1000, scoped, tag = 'output window, operand 2, single buffered']
    %15 = vsyncpa [#allocation3], 0
    %16 = vsyncpa [#allocation6], 0
    %17 = vsyncpa [#allocation9], 0
    %18 = vsyncpa [#allocation4], 0
    %19 = vsyncpa [#allocation12], 0
    // Predicated region
    $region2: #{tpu_custom_call.1} parent=1 // pred_check
      _
    $region3: #{tpu_custom_call.1} parent=1 // pred_check_branch
      %21 = sbr.rel (0) target = $region5
    $region4: #{tpu_custom_call.1} parent=1 // pred_region
      %23 = vsyncadd [#allocation3], 0
      %s25 = sshll.u32 %s0, 4
      %s26 = int_to_ptr.hbm [resolvable:$true] %s25
      %s27 = sshll.u32 [#allocation2], 4
      %s28 = int_to_ptr.vmem [resolvable:$true] %s27
      %30 = dma.hbm_to_vmem [thread:$0]  %s26, 128, %s28, [#allocation3]
    $region5: #{tpu_custom_call.1} parent=1 // pred_fallthru
      _
    // Predicated region
    $region6: #{tpu_custom_call.1} parent=1 // pred_check
      _
    $region7: #{tpu_custom_call.1} parent=1 // pred_check_branch
      %32 = sbr.rel (0) target = $region9
    $region8: #{tpu_custom_call.1} parent=1 // pred_region
      %34 = vsyncadd [#allocation6], 0
      %s35 = sshll.u32 %s1, 4
      %s36 = int_to_ptr.hbm [resolvable:$true] %s35
      %s37 = sshll.u32 [#allocation5], 4
      %s38 = int_to_ptr.vmem [resolvable:$true] %s37
      %43 = dma.hbm_to_vmem [thread:$0]  %s36, 1024, %s38, [#allocation6], 64, 64, 4
    $region9: #{tpu_custom_call.1} parent=1 // pred_fallthru
      _
    // Predicated region
    $region10: #{tpu_custom_call.1} parent=1 // pred_check
      _
    $region11: #{tpu_custom_call.1} parent=1 // pred_check_branch
      %45 = sbr.rel (0) target = $region13
    $region12: #{tpu_custom_call.1} parent=1 // pred_region
      %47 = vsyncadd [#allocation6], 0
      %s48 = sshll.u32 %s2, 4
      %s49 = int_to_ptr.hbm [resolvable:$true] %s48
      %s50 = sshll.u32 [#allocation7], 4
      %s51 = int_to_ptr.vmem [resolvable:$true] %s50
      %56 = dma.hbm_to_vmem [thread:$0]  %s49, 1024, %s51, [#allocation6], 64, 64, 4
    $region13: #{tpu_custom_call.1} parent=1 // pred_fallthru
      _
    // Predicated region
    $region14: #{tpu_custom_call.1} parent=1 // pred_check
      _
    $region15: #{tpu_custom_call.1} parent=1 // pred_check_branch
      %58 = sbr.rel (0) target = $region17
    $region16: #{tpu_custom_call.1} parent=1 // pred_region
      %60 = vsyncadd [#allocation9], 0
      %s61 = sshll.u32 %s3, 4
      %s62 = int_to_ptr.hbm [resolvable:$true] %s61
      %s63 = sshll.u32 [#allocation8], 4
      %s64 = int_to_ptr.vmem [resolvable:$true] %s63
      %69 = dma.hbm_to_vmem [thread:$0]  %s62, 1024, %s64, [#allocation9], 64, 64, 4
    $region17: #{tpu_custom_call.1} parent=1 // pred_fallthru
      _
    // Predicated region
    $region18: #{tpu_custom_call.1} parent=1 // pred_check
      _
    $region19: #{tpu_custom_call.1} parent=1 // pred_check_branch
      %71 = sbr.rel (0) target = $region21
    $region20: #{tpu_custom_call.1} parent=1 // pred_region
      _
    $region21: #{tpu_custom_call.1} parent=1 // pred_fallthru
      _
    // Predicated region
    $region22: #{tpu_custom_call.1} parent=1 // pred_check
      _
    $region23: #{tpu_custom_call.1} parent=1 // pred_check_branch
      %73 = sbr.rel (0) target = $region25
    $region24: #{tpu_custom_call.1} parent=1 // pred_region
      _
    $region25: #{tpu_custom_call.1} parent=1 // pred_fallthru
      _
    // Predicated region
    $region26: #{tpu_custom_call.1} parent=1 // pred_check
      _
    $region27: #{tpu_custom_call.1} parent=1 // pred_check_branch
      %75 = sbr.rel (0) target = $region29
    $region28: #{tpu_custom_call.1} parent=1 // pred_region
      _
    $region29: #{tpu_custom_call.1} parent=1 // pred_fallthru
      _
    // Predicated region
    $region30: #{tpu_custom_call.1} parent=1 // pred_check
      _
    $region31: #{tpu_custom_call.1} parent=1 // pred_check_branch
      %77 = sbr.rel (0) target = $region33
    $region32: #{tpu_custom_call.1} parent=1 // pred_region
      %79 = dma.done [#allocation3], 128
    $region33: #{tpu_custom_call.1} parent=1 // pred_fallthru
      _
    // Predicated region
    $region34: #{tpu_custom_call.1} parent=1 // pred_check
      _
    $region35: #{tpu_custom_call.1} parent=1 // pred_check_branch
      %81 = sbr.rel (0) target = $region37
    $region36: #{tpu_custom_call.1} parent=1 // pred_region
      %83 = dma.done [#allocation6], 1024
    $region37: #{tpu_custom_call.1} parent=1 // pred_fallthru
      _
    // Predicated region
    $region38: #{tpu_custom_call.1} parent=1 // pred_check
      _
    $region39: #{tpu_custom_call.1} parent=1 // pred_check_branch
      %85 = sbr.rel (0) target = $region41
    $region40: #{tpu_custom_call.1} parent=1 // pred_region
      %87 = dma.done [#allocation6], 1024
    $region41: #{tpu_custom_call.1} parent=1 // pred_fallthru
      _
    // Predicated region
    $region42: #{tpu_custom_call.1} parent=1 // pred_check
      _
    $region43: #{tpu_custom_call.1} parent=1 // pred_check_branch
      %89 = sbr.rel (0) target = $region45
    $region44: #{tpu_custom_call.1} parent=1 // pred_region
      %91 = dma.done [#allocation9], 1024
    $region45: #{tpu_custom_call.1} parent=1 // pred_fallthru
      _
    %v92 = vld [vmem:[#allocation2] sm:$0xff]
    %v93 = vpack.c.bf16 %v92, %v92
    %v94 = vld [vmem:[#allocation5] sm:$0xf]
    %v95 = vld [vmem:[#allocation5 + $0x4] sm:$0xf]
    %v96 = vld [vmem:[#allocation5 + $0x8] sm:$0xf]
    %v97 = vld [vmem:[#allocation5 + $0xc] sm:$0xf]
    %v98 = vld [vmem:[#allocation5 + $0x10] sm:$0xf]
    %v99 = vld [vmem:[#allocation5 + $0x14] sm:$0xf]
    %v100 = vld [vmem:[#allocation5 + $0x18] sm:$0xf]
    %v101 = vld [vmem:[#allocation5 + $0x1c] sm:$0xf]
    %v102 = vld [vmem:[#allocation5 + $0x20] sm:$0xf]
    %v103 = vld [vmem:[#allocation5 + $0x24] sm:$0xf]
    %v104 = vld [vmem:[#allocation5 + $0x28] sm:$0xf]
    %v105 = vld [vmem:[#allocation5 + $0x2c] sm:$0xf]
    %v106 = vld [vmem:[#allocation5 + $0x30] sm:$0xf]
    %v107 = vld [vmem:[#allocation5 + $0x34] sm:$0xf]
    %v108 = vld [vmem:[#allocation5 + $0x38] sm:$0xf]
    %v109 = vld [vmem:[#allocation5 + $0x3c] sm:$0xf]
    %v110 = vld [vmem:[%s4] sm:$0x1]
    %v112 = vperm.slane %v110, 0
    %v130 = vunpack.c.l.b16 %v94
    %v131 = vunpack.c.l.b16 %v95
    %v132 = vunpack.c.l.b16 %v96
    %v133 = vunpack.c.l.b16 %v97
    %v134 = vunpack.c.l.b16 %v98
    %v135 = vunpack.c.l.b16 %v99
    %v136 = vunpack.c.l.b16 %v100
    %v137 = vunpack.c.l.b16 %v101
    %v138 = vunpack.c.l.b16 %v102
    %v139 = vunpack.c.l.b16 %v103
    %v140 = vunpack.c.l.b16 %v104
    %v141 = vunpack.c.l.b16 %v105
    %v142 = vunpack.c.l.b16 %v106
    %v143 = vunpack.c.l.b16 %v107
    %v144 = vunpack.c.l.b16 %v108
    %v145 = vunpack.c.l.b16 %v109
    %v146 = vpack.c.b16 %v131, %v130
    %v147 = vpack.c.b16 %v133, %v132
    %v148 = vpack.c.b16 %v135, %v134
    %v149 = vpack.c.b16 %v137, %v136
    %v150 = vpack.c.b16 %v139, %v138
    %v151 = vpack.c.b16 %v141, %v140
    %v152 = vpack.c.b16 %v143, %v142
    %v153 = vpack.c.b16 %v145, %v144
    %162 = vmatpush.bf16.msra.mxu0 %v153
    %163 = vmatpush.bf16.msra.mxu0 %v152
    %164 = vmatpush.bf16.msra.mxu0 %v151
    %165 = vmatpush.bf16.msra.mxu0 %v150
    %166 = vmatpush.bf16.msra.mxu0 %v149
    %167 = vmatpush.bf16.msra.mxu0 %v148
    %168 = vmatpush.bf16.msra.mxu0 %v147
    %169 = vmatpush.bf16.msra.mxu0 %v146
    %170 = vmatmul.bf16.gmra.mxu0 %v93
    %v171 = vpop.f32.mrf.mxu0
    %v172 = vadd.f32 %v112, %v171
    %v173 = vpop.f32.mrf.mxu0
    %174 = vdwg.mxu0
    %175 = vst [vmem:[#allocation10] sm:$0xff] %v172
    %v176 = vpack.c.bf16 %v172, %v172
    %v177 = vld [vmem:[#allocation7] sm:$0xf]
    %v178 = vld [vmem:[#allocation7 + $0x4] sm:$0xf]
    %v179 = vld [vmem:[#allocation7 + $0x8] sm:$0xf]
    %v180 = vld [vmem:[#allocation7 + $0xc] sm:$0xf]
    %v181 = vld [vmem:[#allocation7 + $0x10] sm:$0xf]
    %v182 = vld [vmem:[#allocation7 + $0x14] sm:$0xf]
    %v183 = vld [vmem:[#allocation7 + $0x18] sm:$0xf]
    %v184 = vld [vmem:[#allocation7 + $0x1c] sm:$0xf]
    %v185 = vld [vmem:[#allocation7 + $0x20] sm:$0xf]
    %v186 = vld [vmem:[#allocation7 + $0x24] sm:$0xf]
    %v187 = vld [vmem:[#allocation7 + $0x28] sm:$0xf]
    %v188 = vld [vmem:[#allocation7 + $0x2c] sm:$0xf]
    %v189 = vld [vmem:[#allocation7 + $0x30] sm:$0xf]
    %v190 = vld [vmem:[#allocation7 + $0x34] sm:$0xf]
    %v191 = vld [vmem:[#allocation7 + $0x38] sm:$0xf]
    %v192 = vld [vmem:[#allocation7 + $0x3c] sm:$0xf]
    %v193 = vld [vmem:[%s5] sm:$0x1]
    %v195 = vperm.slane %v193, 0
    %v213 = vunpack.c.l.b16 %v177
    %v214 = vunpack.c.l.b16 %v178
    %v215 = vunpack.c.l.b16 %v179
    %v216 = vunpack.c.l.b16 %v180
    %v217 = vunpack.c.l.b16 %v181
    %v218 = vunpack.c.l.b16 %v182
    %v219 = vunpack.c.l.b16 %v183
    %v220 = vunpack.c.l.b16 %v184
    %v221 = vunpack.c.l.b16 %v185
    %v222 = vunpack.c.l.b16 %v186
    %v223 = vunpack.c.l.b16 %v187
    %v224 = vunpack.c.l.b16 %v188
    %v225 = vunpack.c.l.b16 %v189
    %v226 = vunpack.c.l.b16 %v190
    %v227 = vunpack.c.l.b16 %v191
    %v228 = vunpack.c.l.b16 %v192
    %v229 = vpack.c.b16 %v214, %v213
    %v230 = vpack.c.b16 %v216, %v215
    %v231 = vpack.c.b16 %v218, %v217
    %v232 = vpack.c.b16 %v220, %v219
    %v233 = vpack.c.b16 %v222, %v221
    %v234 = vpack.c.b16 %v224, %v223
    %v235 = vpack.c.b16 %v226, %v225
    %v236 = vpack.c.b16 %v228, %v227
    %245 = vmatpush.bf16.msra.mxu0 %v236
    %246 = vmatpush.bf16.msra.mxu0 %v235
    %247 = vmatpush.bf16.msra.mxu0 %v234
    %248 = vmatpush.bf16.msra.mxu0 %v233
    %249 = vmatpush.bf16.msra.mxu0 %v232
    %250 = vmatpush.bf16.msra.mxu0 %v231
    %251 = vmatpush.bf16.msra.mxu0 %v230
    %252 = vmatpush.bf16.msra.mxu0 %v229
    %253 = vmatmul.bf16.gmra.mxu0 %v176
    %v254 = vpop.f32.mrf.mxu0
    %v255 = vadd.f32 %v195, %v254
    %v256 = vpop.f32.mrf.mxu0
    %257 = vdwg.mxu0
    %258 = vst [vmem:[#allocation11] sm:$0xff] %v255
    %v259 = vpack.c.bf16 %v255, %v255
    %v260 = vld [vmem:[#allocation8] sm:$0xf]
    %v261 = vld [vmem:[#allocation8 + $0x4] sm:$0xf]
    %v262 = vld [vmem:[#allocation8 + $0x8] sm:$0xf]
    %v263 = vld [vmem:[#allocation8 + $0xc] sm:$0xf]
    %v264 = vld [vmem:[#allocation8 + $0x10] sm:$0xf]
    %v265 = vld [vmem:[#allocation8 + $0x14] sm:$0xf]
    %v266 = vld [vmem:[#allocation8 + $0x18] sm:$0xf]
    %v267 = vld [vmem:[#allocation8 + $0x1c] sm:$0xf]
    %v268 = vld [vmem:[#allocation8 + $0x20] sm:$0xf]
    %v269 = vld [vmem:[#allocation8 + $0x24] sm:$0xf]
    %v270 = vld [vmem:[#allocation8 + $0x28] sm:$0xf]
    %v271 = vld [vmem:[#allocation8 + $0x2c] sm:$0xf]
    %v272 = vld [vmem:[#allocation8 + $0x30] sm:$0xf]
    %v273 = vld [vmem:[#allocation8 + $0x34] sm:$0xf]
    %v274 = vld [vmem:[#allocation8 + $0x38] sm:$0xf]
    %v275 = vld [vmem:[#allocation8 + $0x3c] sm:$0xf]
    %v276 = vld [vmem:[%s6] sm:$0x1]
    %v278 = vperm.slane %v276, 0
    %v296 = vunpack.c.l.b16 %v260
    %v297 = vunpack.c.l.b16 %v261
    %v298 = vunpack.c.l.b16 %v262
    %v299 = vunpack.c.l.b16 %v263
    %v300 = vunpack.c.l.b16 %v264
    %v301 = vunpack.c.l.b16 %v265
    %v302 = vunpack.c.l.b16 %v266
    %v303 = vunpack.c.l.b16 %v267
    %v304 = vunpack.c.l.b16 %v268
    %v305 = vunpack.c.l.b16 %v269
    %v306 = vunpack.c.l.b16 %v270
    %v307 = vunpack.c.l.b16 %v271
    %v308 = vunpack.c.l.b16 %v272
    %v309 = vunpack.c.l.b16 %v273
    %v310 = vunpack.c.l.b16 %v274
    %v311 = vunpack.c.l.b16 %v275
    %v312 = vpack.c.b16 %v297, %v296
    %v313 = vpack.c.b16 %v299, %v298
    %v314 = vpack.c.b16 %v301, %v300
    %v315 = vpack.c.b16 %v303, %v302
    %v316 = vpack.c.b16 %v305, %v304
    %v317 = vpack.c.b16 %v307, %v306
    %v318 = vpack.c.b16 %v309, %v308
    %v319 = vpack.c.b16 %v311, %v310
    %328 = vmatpush.bf16.msra.mxu0 %v319
    %329 = vmatpush.bf16.msra.mxu0 %v318
    %330 = vmatpush.bf16.msra.mxu0 %v317
    %331 = vmatpush.bf16.msra.mxu0 %v316
    %332 = vmatpush.bf16.msra.mxu0 %v315
    %333 = vmatpush.bf16.msra.mxu0 %v314
    %334 = vmatpush.bf16.msra.mxu0 %v313
    %335 = vmatpush.bf16.msra.mxu0 %v312
    %336 = vmatmul.bf16.gmra.mxu0 %v259
    %v337 = vpop.f32.mrf.mxu0
    %v338 = vadd.f32 %v278, %v337
    %v339 = vpop.f32.mrf.mxu0
    %340 = vdwg.mxu0
    %341 = vst [vmem:[#allocation13] sm:$0xff] %v338
    // Predicated region
    $region46: #{tpu_custom_call.1} parent=1 // pred_check
      _
    $region47: #{tpu_custom_call.1} parent=1 // pred_check_branch
      %343 = sbr.rel (0) target = $region49
    $region48: #{tpu_custom_call.1} parent=1 // pred_region
      %345 = vsyncadd [#allocation4], 0
      %s347 = sshll.u32 [#allocation10], 4
      %s348 = int_to_ptr.vmem [resolvable:$true] %s347
      %s349 = sshll.u32 %s7, 4
      %s350 = int_to_ptr.hbm [resolvable:$true] %s349
      %352 = dma.vmem_to_hbm [thread:$0]  %s348, 128, %s350, [#allocation4]
    $region49: #{tpu_custom_call.1} parent=1 // pred_fallthru
      _
    // Predicated region
    $region50: #{tpu_custom_call.1} parent=1 // pred_check
      _
    $region51: #{tpu_custom_call.1} parent=1 // pred_check_branch
      %354 = sbr.rel (0) target = $region53
    $region52: #{tpu_custom_call.1} parent=1 // pred_region
      %356 = vsyncadd [#allocation12], 0
      %s358 = sshll.u32 [#allocation11], 4
      %s359 = int_to_ptr.vmem [resolvable:$true] %s358
      %s360 = sshll.u32 %s8, 4
      %s361 = int_to_ptr.hbm [resolvable:$true] %s360
      %363 = dma.vmem_to_hbm [thread:$0]  %s359, 128, %s361, [#allocation12]
    $region53: #{tpu_custom_call.1} parent=1 // pred_fallthru
      _
    // Predicated region
    $region54: #{tpu_custom_call.1} parent=1 // pred_check
      _
    $region55: #{tpu_custom_call.1} parent=1 // pred_check_branch
      %365 = sbr.rel (0) target = $region57
    $region56: #{tpu_custom_call.1} parent=1 // pred_region
      %367 = vsyncadd [#allocation12], 0
      %s369 = sshll.u32 [#allocation13], 4
      %s370 = int_to_ptr.vmem [resolvable:$true] %s369
      %s371 = sshll.u32 %s9, 4
      %s372 = int_to_ptr.hbm [resolvable:$true] %s371
      %374 = dma.vmem_to_hbm [thread:$0]  %s370, 128, %s372, [#allocation12]
    $region57: #{tpu_custom_call.1} parent=1 // pred_fallthru
      _
    // Predicated region
    $region58: #{tpu_custom_call.1} parent=1 // pred_check
      _
    $region59: #{tpu_custom_call.1} parent=1 // pred_check_branch
      %376 = sbr.rel (0) target = $region61
    $region60: #{tpu_custom_call.1} parent=1 // pred_region
      %378 = dma.done [#allocation4], 128
    $region61: #{tpu_custom_call.1} parent=1 // pred_fallthru
      _
    // Predicated region
    $region62: #{tpu_custom_call.1} parent=1 // pred_check
      _
    $region63: #{tpu_custom_call.1} parent=1 // pred_check_branch
      %380 = sbr.rel (0) target = $region65
    $region64: #{tpu_custom_call.1} parent=1 // pred_region
      %382 = dma.done [#allocation12], 128
    $region65: #{tpu_custom_call.1} parent=1 // pred_fallthru
      _
    // Predicated region
    $region66: #{tpu_custom_call.1} parent=1 // pred_check
      _
    $region67: #{tpu_custom_call.1} parent=1 // pred_check_branch
      %384 = sbr.rel (0) target = $region69
    $region68: #{tpu_custom_call.1} parent=1 // pred_region
      %386 = dma.done [#allocation12], 128
    $region69: #{tpu_custom_call.1} parent=1 // pred_fallthru
      _
    %387 = vsyncpa [#allocation3], 1
    %388 = vsyncpa [#allocation6], 1
    %389 = vsyncpa [#allocation9], 1
    %390 = vsyncpa [#allocation4], 1
    %391 = vsyncpa [#allocation12], 1

</llo_original>
